<compile_context>
chip_gen: v5e
topology: v5e:2x2
jax: 0.10.0
libtpu: 0.0.40
codegen_flags: <defaults>
</compile_context>

<pallas_src>
from functools import partial

import jax
import jax.numpy as jnp
from jax import lax
from jax.experimental import pallas as pl
from jax.experimental.pallas import tpu as pltpu

_PAD_LABEL = jnp.iinfo(jnp.int32).min    # sentinel label for padded rows/cols
_NEG_BIG = -1e30                         # "minus infinity" column bias (finite -> no inf-inf NaNs)


def _round_up(x, m):
    return (x + m - 1) // m * m


def _supcon_tile_kernel(feat_q_ref, feat_kt_ref, lab_q_ref, lab_k_ref, bias_ref,
                        loss_ref, single_ref,
                        m_ref, l_ref, s_ref, n_ref,
                        *, inv_t, has_pad):
    qi = pl.program_id(0)
    ki = pl.program_id(1)
    tq = feat_q_ref.shape[0]
    tk = feat_kt_ref.shape[1]

    # ---- init per-row-tile accumulators at the first column tile ------------
    @pl.when(ki == 0)
    def _():
        m_ref[...] = jnp.full_like(m_ref, -jnp.inf)
        l_ref[...] = jnp.zeros_like(l_ref)
        s_ref[...] = jnp.zeros_like(s_ref)
        n_ref[...] = jnp.zeros_like(n_ref)

    # ---- similarity tile on the MXU (canonical (M,K)x(K,N), no transpose) ---
    sim = lax.dot_general(feat_q_ref[...], feat_kt_ref[...],
                          (((1,), (0,)), ((), ())),
                          preferred_element_type=jnp.float32)      # (tq, tk) f32
    sim = sim * jnp.float32(inv_t)                                  # single f32 pass
    if has_pad:
        sim = sim + bias_ref[...]          # (1, tk) broadcast; -1e30 on padded columns

    # ---- online log-sum-exp bookkeeping --------------------------------------
    # (including the diagonal / padded -1e30 columns in the running max is fine:
    #  the max shift cancels exactly in the fused identity, matching the reference)
    m_prev = m_ref[...]
    tile_max = jnp.max(sim, axis=1, keepdims=True)
    m_cur = jnp.maximum(m_prev, tile_max)
    alpha = jnp.exp(m_prev - m_cur)
    e = jnp.exp(sim - m_cur)                       # padded cols underflow to exactly 0
    eq = lab_q_ref[...] == lab_k_ref[...]          # sentinel pad label never matches a real one

    def _accumulate(p, pos_f):
        l_ref[...] = alpha * l_ref[...] + jnp.sum(p, axis=1, keepdims=True)
        s_ref[...] = s_ref[...] + jnp.sum(pos_f * sim, axis=1, keepdims=True)
        n_ref[...] = n_ref[...] + jnp.sum(pos_f, axis=1, keepdims=True)
        m_ref[...] = m_cur

    # Does this (qi, ki) tile straddle the diagonal?
    row_lo = qi * tq
    col_lo = ki * tk
    has_diag = jnp.logical_and(row_lo < col_lo + tk, col_lo < row_lo + tq)

    @pl.when(has_diag)
    def _():
        # slow path: build the diagonal mask only here
        row_g = row_lo + lax.broadcasted_iota(jnp.int32, (tq, tk), 0)
        col_g = col_lo + lax.broadcasted_iota(jnp.int32, (tq, tk), 1)
        not_diag = row_g != col_g
        p = jnp.where(not_diag, e, 0.0)
        pos_f = jnp.where(jnp.logical_and(eq, not_diag), 1.0, 0.0)
        _accumulate(p, pos_f)

    @pl.when(jnp.logical_not(has_diag))
    def _():
        # fast path: no iotas, no selects
        _accumulate(e, eq.astype(jnp.float32))

    # ---- finalize at the last column tile ------------------------------------
    @pl.when(ki == pl.num_programs(1) - 1)
    def _():
        n = n_ref[...]
        lse = m_ref[...] + jnp.log(l_ref[...])     # log sum_{j != i, valid} exp(sim_ij)
        single = (n == 0.0).astype(jnp.float32)
        # sum_j mask*log_prob = sum_j mask*sim - n*lse   (max shift cancels)
        mlpp = jnp.where(n > 0.0, (s_ref[...] - n * lse) / (n + single), 0.0)
        loss_ref[...] = -mlpp * (1.0 - single)
        single_ref[...] = single


def supcon_loss_clear(features, labels, temperature=0.07,
                      compute_dtype=jnp.bfloat16, block_q=256, block_k=1024):
    """features: (B, D) float; labels: (B,) int.  Returns scalar f32 loss."""
    B, D = features.shape
    assert block_q % 8 == 0 and block_k % 128 == 0 and block_k % block_q == 0

    # ---- tile selection -------------------------------------------------------
    Br = _round_up(B, 8)
    if Br <= block_k:
        # Single column tile.  Split rows in two when big enough so the v7x
        # megacore "parallel" axis has >= 2 tiles.
        if Br < 256:
            tq = min(Br, block_q)
        else:
            tq = min(block_q, _round_up(Br // 2, 8))
        Bp = _round_up(B, tq)
        tk = Bp                                   # full-dim block -> lane rule satisfied
    else:
        tq = block_q
        tk = block_k                              # multiple of 128
        Bp = _round_up(B, tk)                     # block_q | block_k | Bp; pad < tk
    nq, nk = Bp // tq, Bp // tk

    # ---- operand prep ---------------------------------------------------------
    feats = features.astype(compute_dtype)
    labs = labels.astype(jnp.int32).reshape(-1)
    pad = Bp - B
    if pad:
        feats = jnp.pad(feats, ((0, pad), (0, 0)))
        labs = jnp.pad(labs, (0, pad), constant_values=_PAD_LABEL)
    feats_t = feats.T                                            # (D, Bp): MXU RHS
    lab_row = labs.reshape(Bp, 1)
    lab_col = labs.reshape(1, Bp)
    col_bias = jnp.where(jnp.arange(Bp) < B, 0.0, _NEG_BIG).astype(jnp.float32).reshape(1, Bp)

    kernel = partial(_supcon_tile_kernel,
                     inv_t=1.0 / float(temperature), has_pad=bool(pad))

    itemsize = jnp.dtype(compute_dtype).itemsize
    cost = pl.CostEstimate(
        flops=2 * Bp * Bp * D,
        transcendentals=Bp * Bp,
        bytes_accessed=(Bp * D * itemsize              # anchor rows (resident per row tile)
                        + nq * Bp * D * itemsize       # contrast operand re-read per row tile
                        + (nq + 1) * Bp * 4            # labels
                        + nq * Bp * 4                  # column bias
                        + 2 * Bp * 4),                 # outputs
    )

    grid_spec = pltpu.PrefetchScalarGridSpec(
        num_scalar_prefetch=0,
        grid=(nq, nk),
        in_specs=[
            pl.BlockSpec((tq, D), lambda i, j: (i, 0)),   # anchor (row) tile, resident over j
            pl.BlockSpec((D, tk), lambda i, j: (0, j)),   # contrast tile, pre-transposed
            pl.BlockSpec((tq, 1), lambda i, j: (i, 0)),   # row labels
            pl.BlockSpec((1, tk), lambda i, j: (0, j)),   # col labels
            pl.BlockSpec((1, tk), lambda i, j: (0, j)),   # pad column bias
        ],
        out_specs=[
            pl.BlockSpec((tq, 1), lambda i, j: (i, 0)),   # per-row loss
            pl.BlockSpec((tq, 1), lambda i, j: (i, 0)),   # per-row single flag
        ],
        scratch_shapes=[
            pltpu.VMEM((tq, 1), jnp.float32),   # running max  m
            pltpu.VMEM((tq, 1), jnp.float32),   # running sum-exp  l
            pltpu.VMEM((tq, 1), jnp.float32),   # sum(mask * logits)  s
            pltpu.VMEM((tq, 1), jnp.float32),   # mask row-sum  n
        ],
    )

    loss_vec, single_vec = pl.pallas_call(
        kernel,
        grid_spec=grid_spec,
        out_shape=(
            jax.ShapeDtypeStruct((Bp, 1), jnp.float32),
            jax.ShapeDtypeStruct((Bp, 1), jnp.float32),
        ),
        compiler_params=pltpu.CompilerParams(
            dimension_semantics=("parallel", "arbitrary")),
        cost_estimate=cost,
    )(feats, feats_t, lab_row, lab_col, col_bias)

    # Final scalar reduction over real (non-padded) rows in plain JAX.
    loss_vec = loss_vec[:B, 0]
    single_vec = single_vec[:B, 0]
    return jnp.sum(loss_vec) / (jnp.float32(B) - jnp.sum(single_vec))


def _reference(features, labels, temperature=0.07, compute_dtype=jnp.float32):
    # Pure-JAX mirror of the PyTorch forward (and of the kernel's operand dtype).
    B = features.shape[0]
    f = features.astype(compute_dtype).astype(jnp.float32)
    sim = jnp.matmul(f, f.T, precision=lax.Precision.HIGHEST) / jnp.float32(temperature)
    lab = labels.reshape(-1, 1)
    mask = (lab == lab.T).astype(jnp.float32)
    logits = sim - jnp.max(sim, axis=1, keepdims=True)
    logits_mask = 1.0 - jnp.eye(B, dtype=jnp.float32)
    mask = mask * logits_mask
    single = (mask.sum(1) == 0).astype(jnp.float32)
    exp_logits = jnp.exp(logits) * logits_mask
    log_prob = logits - jnp.log(exp_logits.sum(1, keepdims=True))
    mean_log_prob_pos = (mask * log_prob).sum(1) / (mask.sum(1) + single)
    loss = -mean_log_prob_pos * (1.0 - single)
    return loss.sum() / (B - single.sum())


if __name__ == "__main__":
    key = jax.random.PRNGKey(0)
    kf, kl = jax.random.split(key)

    # 1) Small single-tile case (B=8, D=32), bf16 MXU operands (default path).
    B, D = 8, 32
    feats = jax.random.normal(kf, (B, D), dtype=jnp.float32)
    feats = feats / jnp.linalg.norm(feats, axis=1, keepdims=True)
    labels = jax.random.randint(kl, (B,), 0, 3, dtype=jnp.int32)

    loss_bf16 = supcon_loss_clear(feats, labels, temperature=0.07)
    jax.block_until_ready(loss_bf16)
    ref_bf16 = _reference(feats, labels, 0.07, compute_dtype=jnp.bfloat16)
    assert jnp.allclose(loss_bf16, ref_bf16, rtol=2e-3, atol=2e-3), (loss_bf16, ref_bf16)

    # 2) Full-f32 path, same shapes.
    loss_f32 = supcon_loss_clear(feats, labels, temperature=0.07,
                                 compute_dtype=jnp.float32)
    jax.block_until_ready(loss_f32)
    ref_f32 = _reference(feats, labels, 0.07, compute_dtype=jnp.float32)
    assert jnp.allclose(loss_f32, ref_f32, rtol=2e-3, atol=2e-3), (loss_f32, ref_f32)

    # 3) Multi-tile + padding + diag/off-diag fast paths + pad-bias path:
    #    B=200 with tq=64, tk=128 -> Bp=256, grid (4, 2).
    B2, D2 = 200, 64
    kf2, kl2 = jax.random.split(jax.random.PRNGKey(1))
    feats2 = jax.random.normal(kf2, (B2, D2), dtype=jnp.float32)
    feats2 = feats2 / jnp.linalg.norm(feats2, axis=1, keepdims=True)
    labels2 = jax.random.randint(kl2, (B2,), 0, 10, dtype=jnp.int32)
    loss2 = supcon_loss_clear(feats2, labels2, temperature=0.07,
                              block_q=64, block_k=128)
    jax.block_until_ready(loss2)
    ref2 = _reference(feats2, labels2, 0.07, compute_dtype=jnp.bfloat16)
    assert jnp.allclose(loss2, ref2, rtol=2e-3, atol=2e-3), (loss2, ref2)

    # 4) Default tiling with the megacore row split (B=256 -> tq=128, grid (2, 1)).
    B3, D3 = 256, 32
    kf3, kl3 = jax.random.split(jax.random.PRNGKey(2))
    feats3 = jax.random.normal(kf3, (B3, D3), dtype=jnp.float32)
    feats3 = feats3 / jnp.linalg.norm(feats3, axis=1, keepdims=True)
    labels3 = jax.random.randint(kl3, (B3,), 0, 5, dtype=jnp.int32)
    loss3 = supcon_loss_clear(feats3, labels3, temperature=0.07)
    jax.block_until_ready(loss3)
    ref3 = _reference(feats3, labels3, 0.07, compute_dtype=jnp.bfloat16)
    assert jnp.allclose(loss3, ref3, rtol=2e-3, atol=2e-3), (loss3, ref3)

    print("KERNEL_OK")
</pallas_src>

<mosaic_0001>
module attributes {stable_mosaic.version = 11 : i64} {
  func.func @_supcon_tile_kernel(%arg0: i32, %arg1: i32, %arg2: memref<8x32xbf16, #tpu.memory_space<vmem>>, %arg3: memref<32x8xbf16, #tpu.memory_space<vmem>>, %arg4: memref<8x1xi32, #tpu.memory_space<vmem>>, %arg5: memref<1x8xi32, #tpu.memory_space<vmem>>, %arg6: memref<1x8xf32, #tpu.memory_space<vmem>>, %arg7: memref<8x1xf32, #tpu.memory_space<vmem>>, %arg8: memref<8x1xf32, #tpu.memory_space<vmem>>, %arg9: memref<8x1xf32, #tpu.memory_space<vmem>>, %arg10: memref<8x1xf32, #tpu.memory_space<vmem>>, %arg11: memref<8x1xf32, #tpu.memory_space<vmem>>, %arg12: memref<8x1xf32, #tpu.memory_space<vmem>>) attributes {dimension_semantics = [#tpu.dimension_semantics<parallel>, #tpu.dimension_semantics<arbitrary>], iteration_bounds = array<i64: 1, 1>, scalar_prefetch = 0 : i64, scratch_operands = 4 : i64, tpu.core_type = #tpu.core_type<tc>, window_params = [{transform_indices = @transform_0, window_bounds = array<i64: 8, 32>}, {transform_indices = @transform_1, window_bounds = array<i64: 32, 8>}, {transform_indices = @transform_2, window_bounds = array<i64: 8, 1>}, {transform_indices = @transform_3, window_bounds = array<i64: 1, 8>}, {transform_indices = @transform_4, window_bounds = array<i64: 1, 8>}, {transform_indices = @transform_5, window_bounds = array<i64: 8, 1>}, {transform_indices = @transform_6, window_bounds = array<i64: 8, 1>}]} {
    %c0_i32 = arith.constant 0 : i32
    %0 = arith.cmpi eq, %arg1, %c0_i32 : i32
    %1 = arith.extui %0 : i1 to i32
    %c0_i32_0 = arith.constant 0 : i32
    %2 = arith.cmpi ne, %1, %c0_i32_0 : i32
    scf.if %2 {
      %cst_19 = arith.constant 0xFF800000 : f32
      %37 = vector.broadcast %cst_19 : f32 to vector<8x1xf32>
      %c0_20 = arith.constant 0 : index
      %c0_21 = arith.constant 0 : index
      %38 = vector.load %arg9[%c0_20, %c0_21] : memref<8x1xf32, #tpu.memory_space<vmem>>, vector<8x1xf32>
      tpu.vector_store %arg9[%c0_20, %c0_21], %37 {strides = array<i32>} : memref<8x1xf32, #tpu.memory_space<vmem>>, vector<8x1xf32>,
      %cst_22 = arith.constant 0.000000e+00 : f32
      %39 = vector.broadcast %cst_22 : f32 to vector<8x1xf32>
      %c0_23 = arith.constant 0 : index
      %c0_24 = arith.constant 0 : index
      %40 = vector.load %arg10[%c0_23, %c0_24] : memref<8x1xf32, #tpu.memory_space<vmem>>, vector<8x1xf32>
      tpu.vector_store %arg10[%c0_23, %c0_24], %39 {strides = array<i32>} : memref<8x1xf32, #tpu.memory_space<vmem>>, vector<8x1xf32>,
      %cst_25 = arith.constant 0.000000e+00 : f32
      %41 = vector.broadcast %cst_25 : f32 to vector<8x1xf32>
      %c0_26 = arith.constant 0 : index
      %c0_27 = arith.constant 0 : index
      %42 = vector.load %arg11[%c0_26, %c0_27] : memref<8x1xf32, #tpu.memory_space<vmem>>, vector<8x1xf32>
      tpu.vector_store %arg11[%c0_26, %c0_27], %41 {strides = array<i32>} : memref<8x1xf32, #tpu.memory_space<vmem>>, vector<8x1xf32>,
      %cst_28 = arith.constant 0.000000e+00 : f32
      %43 = vector.broadcast %cst_28 : f32 to vector<8x1xf32>
      %c0_29 = arith.constant 0 : index
      %c0_30 = arith.constant 0 : index
      %44 = vector.load %arg12[%c0_29, %c0_30] : memref<8x1xf32, #tpu.memory_space<vmem>>, vector<8x1xf32>
      tpu.vector_store %arg12[%c0_29, %c0_30], %43 {strides = array<i32>} : memref<8x1xf32, #tpu.memory_space<vmem>>, vector<8x1xf32>,
    } else {
    }
    %c0 = arith.constant 0 : index
    %c0_1 = arith.constant 0 : index
    %3 = vector.load %arg2[%c0, %c0_1] : memref<8x32xbf16, #tpu.memory_space<vmem>>, vector<8x32xbf16>
    %c0_2 = arith.constant 0 : index
    %c0_3 = arith.constant 0 : index
    %4 = vector.load %arg3[%c0_2, %c0_3] : memref<32x8xbf16, #tpu.memory_space<vmem>>, vector<32x8xbf16>
    %cst = arith.constant dense<0.000000e+00> : vector<8x8xf32>
    %5 = tpu.matmul %3, %4, %cst {dimension_numbers = #tpu.dot_dimension_numbers<[1], [0], [0], [1], [0, 0, 1, 1], [], []>} : vector<8x32xbf16>, vector<32x8xbf16>, vector<8x8xf32> -> vector<8x8xf32>
    %cst_4 = arith.constant 14.2857141 : f32
    %6 = vector.broadcast %cst_4 : f32 to vector<8x8xf32>
    %7 = arith.mulf %5, %6 : vector<8x8xf32>
    %c0_5 = arith.constant 0 : index
    %c0_6 = arith.constant 0 : index
    %8 = vector.load %arg9[%c0_5, %c0_6] : memref<8x1xf32, #tpu.memory_space<vmem>>, vector<8x1xf32>
    %cst_7 = arith.constant dense<0xFF800000> : vector<8xf32>
    %9 = vector.multi_reduction <maximumf>, %7, %cst_7 [1] : vector<8x8xf32> to vector<8xf32>
    %10 = vector.shape_cast %9 : vector<8xf32> to vector<8x1xf32>
    %11 = arith.maximumf %8, %10 : vector<8x1xf32>
    %12 = arith.subf %8, %11 : vector<8x1xf32>
    %13 = math.exp %12 : vector<8x1xf32>
    %14 = vector.broadcast %11 : vector<8x1xf32> to vector<8x8xf32>
    %15 = arith.subf %7, %14 : vector<8x8xf32>
    %16 = math.exp %15 : vector<8x8xf32>
    %c0_8 = arith.constant 0 : index
    %c0_9 = arith.constant 0 : index
    %17 = vector.load %arg4[%c0_8, %c0_9] : memref<8x1xi32, #tpu.memory_space<vmem>>, vector<8x1xi32>
    %c0_10 = arith.constant 0 : index
    %c0_11 = arith.constant 0 : index
    %18 = vector.load %arg5[%c0_10, %c0_11] : memref<1x8xi32, #tpu.memory_space<vmem>>, vector<1x8xi32>
    %19 = vector.broadcast %17 : vector<8x1xi32> to vector<8x8xi32>
    %20 = vector.broadcast %18 : vector<1x8xi32> to vector<8x8xi32>
    %21 = arith.cmpi eq, %19, %20 : vector<8x8xi32>
    %c8_i32 = arith.constant 8 : i32
    %22 = arith.muli %arg0, %c8_i32 : i32
    %c8_i32_12 = arith.constant 8 : i32
    %23 = arith.muli %arg1, %c8_i32_12 : i32
    %c8_i32_13 = arith.constant 8 : i32
    %24 = arith.addi %23, %c8_i32_13 : i32
    %25 = arith.cmpi slt, %22, %24 : i32
    %c8_i32_14 = arith.constant 8 : i32
    %26 = arith.addi %22, %c8_i32_14 : i32
    %27 = arith.cmpi slt, %23, %26 : i32
    %28 = arith.andi %25, %27 : i1
    %29 = arith.extui %28 : i1 to i32
    %c0_i32_15 = arith.constant 0 : i32
    %30 = arith.cmpi ne, %29, %c0_i32_15 : i32
    scf.if %30 {
      %37 = tpu.iota {dimensions = array<i32: 0>} : vector<8x8xi32>
      %38 = vector.broadcast %22 : i32 to vector<8x8xi32>
      %39 = arith.addi %38, %37 : vector<8x8xi32>
      %40 = tpu.iota {dimensions = array<i32: 1>} : vector<8x8xi32>
      %41 = vector.broadcast %23 : i32 to vector<8x8xi32>
      %42 = arith.addi %41, %40 : vector<8x8xi32>
      %43 = arith.cmpi ne, %39, %42 : vector<8x8xi32>
      %cst_19 = arith.constant 0.000000e+00 : f32
      %44 = vector.broadcast %cst_19 : f32 to vector<8x8xf32>
      %45 = arith.select %43, %16, %44 : vector<8x8xi1>, vector<8x8xf32>
      %46 = arith.andi %21, %43 : vector<8x8xi1>
      %cst_20 = arith.constant 1.000000e+00 : f32
      %cst_21 = arith.constant 0.000000e+00 : f32
      %47 = vector.broadcast %cst_20 : f32 to vector<8x8xf32>
      %48 = vector.broadcast %cst_21 : f32 to vector<8x8xf32>
      %49 = arith.select %46, %47, %48 : vector<8x8xi1>, vector<8x8xf32>
      %c0_22 = arith.constant 0 : index
      %c0_23 = arith.constant 0 : index
      %50 = vector.load %arg10[%c0_22, %c0_23] : memref<8x1xf32, #tpu.memory_space<vmem>>, vector<8x1xf32>
      %51 = arith.mulf %13, %50 : vector<8x1xf32>
      %cst_24 = arith.constant dense<0.000000e+00> : vector<8xf32>
      %52 = vector.multi_reduction <add>, %45, %cst_24 [1] : vector<8x8xf32> to vector<8xf32>
      %53 = vector.shape_cast %52 : vector<8xf32> to vector<8x1xf32>
      %54 = arith.addf %51, %53 : vector<8x1xf32>
      %c0_25 = arith.constant 0 : index
      %c0_26 = arith.constant 0 : index
      %55 = vector.load %arg10[%c0_25, %c0_26] : memref<8x1xf32, #tpu.memory_space<vmem>>, vector<8x1xf32>
      tpu.vector_store %arg10[%c0_25, %c0_26], %54 {strides = array<i32>} : memref<8x1xf32, #tpu.memory_space<vmem>>, vector<8x1xf32>,
      %c0_27 = arith.constant 0 : index
      %c0_28 = arith.constant 0 : index
      %56 = vector.load %arg11[%c0_27, %c0_28] : memref<8x1xf32, #tpu.memory_space<vmem>>, vector<8x1xf32>
      %57 = arith.mulf %49, %7 : vector<8x8xf32>
      %cst_29 = arith.constant dense<0.000000e+00> : vector<8xf32>
      %58 = vector.multi_reduction <add>, %57, %cst_29 [1] : vector<8x8xf32> to vector<8xf32>
      %59 = vector.shape_cast %58 : vector<8xf32> to vector<8x1xf32>
      %60 = arith.addf %56, %59 : vector<8x1xf32>
      %c0_30 = arith.constant 0 : index
      %c0_31 = arith.constant 0 : index
      %61 = vector.load %arg11[%c0_30, %c0_31] : memref<8x1xf32, #tpu.memory_space<vmem>>, vector<8x1xf32>
      tpu.vector_store %arg11[%c0_30, %c0_31], %60 {strides = array<i32>} : memref<8x1xf32, #tpu.memory_space<vmem>>, vector<8x1xf32>,
      %c0_32 = arith.constant 0 : index
      %c0_33 = arith.constant 0 : index
      %62 = vector.load %arg12[%c0_32, %c0_33] : memref<8x1xf32, #tpu.memory_space<vmem>>, vector<8x1xf32>
      %cst_34 = arith.constant dense<0.000000e+00> : vector<8xf32>
      %63 = vector.multi_reduction <add>, %49, %cst_34 [1] : vector<8x8xf32> to vector<8xf32>
      %64 = vector.shape_cast %63 : vector<8xf32> to vector<8x1xf32>
      %65 = arith.addf %62, %64 : vector<8x1xf32>
      %c0_35 = arith.constant 0 : index
      %c0_36 = arith.constant 0 : index
      %66 = vector.load %arg12[%c0_35, %c0_36] : memref<8x1xf32, #tpu.memory_space<vmem>>, vector<8x1xf32>
      tpu.vector_store %arg12[%c0_35, %c0_36], %65 {strides = array<i32>} : memref<8x1xf32, #tpu.memory_space<vmem>>, vector<8x1xf32>,
      %c0_37 = arith.constant 0 : index
      %c0_38 = arith.constant 0 : index
      %67 = vector.load %arg9[%c0_37, %c0_38] : memref<8x1xf32, #tpu.memory_space<vmem>>, vector<8x1xf32>
      tpu.vector_store %arg9[%c0_37, %c0_38], %11 {strides = array<i32>} : memref<8x1xf32, #tpu.memory_space<vmem>>, vector<8x1xf32>,
    } else {
    }
    %true = arith.constant true
    %31 = arith.xori %28, %true : i1
    %32 = arith.extui %31 : i1 to i32
    %c0_i32_16 = arith.constant 0 : i32
    %33 = arith.cmpi ne, %32, %c0_i32_16 : i32
    scf.if %33 {
      %37 = arith.extui %21 : vector<8x8xi1> to vector<8x8xi32>
      %38 = arith.sitofp %37 : vector<8x8xi32> to vector<8x8xf32>
      %c0_19 = arith.constant 0 : index
      %c0_20 = arith.constant 0 : index
      %39 = vector.load %arg10[%c0_19, %c0_20] : memref<8x1xf32, #tpu.memory_space<vmem>>, vector<8x1xf32>
      %40 = arith.mulf %13, %39 : vector<8x1xf32>
      %cst_21 = arith.constant dense<0.000000e+00> : vector<8xf32>
      %41 = vector.multi_reduction <add>, %16, %cst_21 [1] : vector<8x8xf32> to vector<8xf32>
      %42 = vector.shape_cast %41 : vector<8xf32> to vector<8x1xf32>
      %43 = arith.addf %40, %42 : vector<8x1xf32>
      %c0_22 = arith.constant 0 : index
      %c0_23 = arith.constant 0 : index
      %44 = vector.load %arg10[%c0_22, %c0_23] : memref<8x1xf32, #tpu.memory_space<vmem>>, vector<8x1xf32>
      tpu.vector_store %arg10[%c0_22, %c0_23], %43 {strides = array<i32>} : memref<8x1xf32, #tpu.memory_space<vmem>>, vector<8x1xf32>,
      %c0_24 = arith.constant 0 : index
      %c0_25 = arith.constant 0 : index
      %45 = vector.load %arg11[%c0_24, %c0_25] : memref<8x1xf32, #tpu.memory_space<vmem>>, vector<8x1xf32>
      %46 = arith.mulf %38, %7 : vector<8x8xf32>
      %cst_26 = arith.constant dense<0.000000e+00> : vector<8xf32>
      %47 = vector.multi_reduction <add>, %46, %cst_26 [1] : vector<8x8xf32> to vector<8xf32>
      %48 = vector.shape_cast %47 : vector<8xf32> to vector<8x1xf32>
      %49 = arith.addf %45, %48 : vector<8x1xf32>
      %c0_27 = arith.constant 0 : index
      %c0_28 = arith.constant 0 : index
      %50 = vector.load %arg11[%c0_27, %c0_28] : memref<8x1xf32, #tpu.memory_space<vmem>>, vector<8x1xf32>
      tpu.vector_store %arg11[%c0_27, %c0_28], %49 {strides = array<i32>} : memref<8x1xf32, #tpu.memory_space<vmem>>, vector<8x1xf32>,
      %c0_29 = arith.constant 0 : index
      %c0_30 = arith.constant 0 : index
      %51 = vector.load %arg12[%c0_29, %c0_30] : memref<8x1xf32, #tpu.memory_space<vmem>>, vector<8x1xf32>
      %cst_31 = arith.constant dense<0.000000e+00> : vector<8xf32>
      %52 = vector.multi_reduction <add>, %38, %cst_31 [1] : vector<8x8xf32> to vector<8xf32>
      %53 = vector.shape_cast %52 : vector<8xf32> to vector<8x1xf32>
      %54 = arith.addf %51, %53 : vector<8x1xf32>
      %c0_32 = arith.constant 0 : index
      %c0_33 = arith.constant 0 : index
      %55 = vector.load %arg12[%c0_32, %c0_33] : memref<8x1xf32, #tpu.memory_space<vmem>>, vector<8x1xf32>
      tpu.vector_store %arg12[%c0_32, %c0_33], %54 {strides = array<i32>} : memref<8x1xf32, #tpu.memory_space<vmem>>, vector<8x1xf32>,
      %c0_34 = arith.constant 0 : index
      %c0_35 = arith.constant 0 : index
      %56 = vector.load %arg9[%c0_34, %c0_35] : memref<8x1xf32, #tpu.memory_space<vmem>>, vector<8x1xf32>
      tpu.vector_store %arg9[%c0_34, %c0_35], %11 {strides = array<i32>} : memref<8x1xf32, #tpu.memory_space<vmem>>, vector<8x1xf32>,
    } else {
    }
    %c0_i32_17 = arith.constant 0 : i32
    %34 = arith.cmpi eq, %arg1, %c0_i32_17 : i32
    %35 = arith.extui %34 : i1 to i32
    %c0_i32_18 = arith.constant 0 : i32
    %36 = arith.cmpi ne, %35, %c0_i32_18 : i32
    scf.if %36 {
      %c0_19 = arith.constant 0 : index
      %c0_20 = arith.constant 0 : index
      %37 = vector.load %arg12[%c0_19, %c0_20] : memref<8x1xf32, #tpu.memory_space<vmem>>, vector<8x1xf32>
      %c0_21 = arith.constant 0 : index
      %c0_22 = arith.constant 0 : index
      %38 = vector.load %arg9[%c0_21, %c0_22] : memref<8x1xf32, #tpu.memory_space<vmem>>, vector<8x1xf32>
      %c0_23 = arith.constant 0 : index
      %c0_24 = arith.constant 0 : index
      %39 = vector.load %arg10[%c0_23, %c0_24] : memref<8x1xf32, #tpu.memory_space<vmem>>, vector<8x1xf32>
      %40 = math.log %39 : vector<8x1xf32>
      %41 = arith.addf %38, %40 : vector<8x1xf32>
      %cst_25 = arith.constant 0.000000e+00 : f32
      %42 = vector.broadcast %cst_25 : f32 to vector<8x1xf32>
      %43 = arith.cmpf oeq, %37, %42 : vector<8x1xf32>
      %44 = arith.extui %43 : vector<8x1xi1> to vector<8x1xi32>
      %45 = arith.sitofp %44 : vector<8x1xi32> to vector<8x1xf32>
      %cst_26 = arith.constant 0.000000e+00 : f32
      %46 = vector.broadcast %cst_26 : f32 to vector<8x1xf32>
      %47 = arith.cmpf ogt, %37, %46 : vector<8x1xf32>
      %c0_27 = arith.constant 0 : index
      %c0_28 = arith.constant 0 : index
      %48 = vector.load %arg11[%c0_27, %c0_28] : memref<8x1xf32, #tpu.memory_space<vmem>>, vector<8x1xf32>
      %49 = arith.mulf %37, %41 : vector<8x1xf32>
      %50 = arith.subf %48, %49 : vector<8x1xf32>
      %51 = arith.addf %37, %45 : vector<8x1xf32>
      %52 = arith.divf %50, %51 : vector<8x1xf32>
      %cst_29 = arith.constant 0.000000e+00 : f32
      %53 = vector.broadcast %cst_29 : f32 to vector<8x1xf32>
      %54 = arith.select %47, %52, %53 : vector<8x1xi1>, vector<8x1xf32>
      %cst_30 = arith.constant 0.000000e+00 : f32
      %55 = vector.broadcast %cst_30 : f32 to vector<8x1xf32>
      %56 = arith.subf %55, %54 : vector<8x1xf32>
      %cst_31 = arith.constant 1.000000e+00 : f32
      %57 = vector.broadcast %cst_31 : f32 to vector<8x1xf32>
      %58 = arith.subf %57, %45 : vector<8x1xf32>
      %59 = arith.mulf %56, %58 : vector<8x1xf32>
      %c0_32 = arith.constant 0 : index
      %c0_33 = arith.constant 0 : index
      %60 = vector.load %arg7[%c0_32, %c0_33] : memref<8x1xf32, #tpu.memory_space<vmem>>, vector<8x1xf32>
      tpu.vector_store %arg7[%c0_32, %c0_33], %59 {strides = array<i32>} : memref<8x1xf32, #tpu.memory_space<vmem>>, vector<8x1xf32>,
      %c0_34 = arith.constant 0 : index
      %c0_35 = arith.constant 0 : index
      %61 = vector.load %arg8[%c0_34, %c0_35] : memref<8x1xf32, #tpu.memory_space<vmem>>, vector<8x1xf32>
      tpu.vector_store %arg8[%c0_34, %c0_35], %45 {strides = array<i32>} : memref<8x1xf32, #tpu.memory_space<vmem>>, vector<8x1xf32>,
    } else {
    }
    return
  }
  func.func @transform_0(%arg0: i32, %arg1: i32) -> (i32, i32) {
    %c0_i32 = arith.constant 0 : i32
    %c0_i32_0 = arith.constant 0 : i32
    return %arg0, %c0_i32 : i32, i32
  }
  func.func @transform_1(%arg0: i32, %arg1: i32) -> (i32, i32) {
    %c0_i32 = arith.constant 0 : i32
    %c0_i32_0 = arith.constant 0 : i32
    return %c0_i32, %arg1 : i32, i32
  }
  func.func @transform_2(%arg0: i32, %arg1: i32) -> (i32, i32) {
    %c0_i32 = arith.constant 0 : i32
    %c0_i32_0 = arith.constant 0 : i32
    return %arg0, %c0_i32 : i32, i32
  }
  func.func @transform_3(%arg0: i32, %arg1: i32) -> (i32, i32) {
    %c0_i32 = arith.constant 0 : i32
    %c0_i32_0 = arith.constant 0 : i32
    return %c0_i32, %arg1 : i32, i32
  }
  func.func @transform_4(%arg0: i32, %arg1: i32) -> (i32, i32) {
    %c0_i32 = arith.constant 0 : i32
    %c0_i32_0 = arith.constant 0 : i32
    return %c0_i32, %arg1 : i32, i32
  }
  func.func @transform_5(%arg0: i32, %arg1: i32) -> (i32, i32) {
    %c0_i32 = arith.constant 0 : i32
    %c0_i32_0 = arith.constant 0 : i32
    return %arg0, %c0_i32 : i32, i32
  }
  func.func @transform_6(%arg0: i32, %arg1: i32) -> (i32, i32) {
    %c0_i32 = arith.constant 0 : i32
    %c0_i32_0 = arith.constant 0 : i32
    return %arg0, %c0_i32 : i32, i32
  }
}

</mosaic_0001>

<llo_original>
// kernel: tpu_custom_call.1
$region0: #{tpu_custom_call.1}
  #allocation0 [shape = 'u32[]', space=smem, size = 0x4, offset = 0x4, fixed_abs, tag = 'smem constant byte address 0x4 - core index']
  #allocation1 [shape = 'u32[72,128]{1,0:T(1,128)}', space=vmem, size = 0x9000, scoped, tag = 'internal scratch']
  #allocation2 [shape = 'f32[8,1]{1,0:T(8,128)}', space=vmem, size = 0x1000, scoped, tag = 'scratch operand']
  #allocation3 [shape = 'f32[8,1]{1,0:T(8,128)}', space=vmem, size = 0x1000, scoped, tag = 'scratch operand']
  #allocation4 [shape = 'f32[8,1]{1,0:T(8,128)}', space=vmem, size = 0x1000, scoped, tag = 'scratch operand']
  #allocation5 [shape = 'f32[8,1]{1,0:T(8,128)}', space=vmem, size = 0x1000, scoped, tag = 'scratch operand']
  %s0 = inlined_call_operand.vmem [shape: bf16[8,32], index: 0, kind: input, shape index: {}]
  %s1 = inlined_call_operand.vmem [shape: bf16[32,8], index: 1, kind: input, shape index: {}]
  %s2 = inlined_call_operand.vmem [shape: s32[8,1], index: 2, kind: input, shape index: {}]
  %s3 = inlined_call_operand.vmem [shape: s32[1,8], index: 3, kind: input, shape index: {}]
  %s4 = inlined_call_operand.vmem [shape: f32[1,8], index: 4, kind: input, shape index: {}]
  %s5 = inlined_call_operand.vmem [shape: f32[8,1], index: 5, kind: output, shape index: {0}]
  %s6 = inlined_call_operand.vmem [shape: f32[8,1], index: 6, kind: output, shape index: {1}]
  %7 = xla_tuple %s5, %s6
  %s8 = sld [smem:[#allocation0]]
  $region54: #{tpu_custom_call.1} parent=0
    _
  %s10 = ssub.s32 1, %s8
  %s11 = scalar_select 0, %s10, %s8
  // Predicated region
  $region2: #{tpu_custom_call.1} parent=0 // pred_check
    _
  $region3: #{tpu_custom_call.1} parent=0 // pred_check_branch
    %13 = sbr.rel (0) target = $region5
  $region4: #{tpu_custom_call.1} parent=0 // pred_region
    _
  $region5: #{tpu_custom_call.1} parent=0 // pred_fallthru
    _
  // Predicated region
  $region6: #{tpu_custom_call.1} parent=0 // pred_check
    _
  $region7: #{tpu_custom_call.1} parent=0 // pred_check_branch
    %15 = sbr.rel (0) target = $region9
  $region8: #{tpu_custom_call.1} parent=0 // pred_region
    _
  $region9: #{tpu_custom_call.1} parent=0 // pred_fallthru
    _
  // Predicated region
  $region10: #{tpu_custom_call.1} parent=0 // pred_check
    _
  $region11: #{tpu_custom_call.1} parent=0 // pred_check_branch
    %17 = sbr.rel (0) target = $region13
  $region12: #{tpu_custom_call.1} parent=0 // pred_region
    _
  $region13: #{tpu_custom_call.1} parent=0 // pred_fallthru
    _
  // Predicated region
  $region14: #{tpu_custom_call.1} parent=0 // pred_check
    _
  $region15: #{tpu_custom_call.1} parent=0 // pred_check_branch
    %19 = sbr.rel (0) target = $region17
  $region16: #{tpu_custom_call.1} parent=0 // pred_region
    _
  $region17: #{tpu_custom_call.1} parent=0 // pred_fallthru
    _
  // Predicated region
  $region18: #{tpu_custom_call.1} parent=0 // pred_check
    _
  $region19: #{tpu_custom_call.1} parent=0 // pred_check_branch
    %21 = sbr.rel (0) target = $region21
  $region20: #{tpu_custom_call.1} parent=0 // pred_region
    _
  $region21: #{tpu_custom_call.1} parent=0 // pred_fallthru
    _
  %p23 = scmp.eq.s32.totalorder 0, 0
  // Predicated region
  $region22: #{tpu_custom_call.1} parent=0 // pred_check
    %p24 = pneg %p23
  $region23: #{tpu_custom_call.1} parent=0 // pred_check_branch
    %26 = sbr.rel (%p24) target = $region25
  $region24: #{tpu_custom_call.1} parent=0 // pred_region
    %vm27 = vcmask 7168
    %28 = vst.msk [vmem:[#allocation2] sm:$0xff] %vm27, -inf
    %29 = vst.msk [vmem:[#allocation3] sm:$0xff] %vm27, 0.0
    %30 = vst.msk [vmem:[#allocation4] sm:$0xff] %vm27, 0.0
    %31 = vst.msk [vmem:[#allocation5] sm:$0xff] %vm27, 0.0
  $region25: #{tpu_custom_call.1} parent=0 // pred_fallthru
    _
  %v32 = vld [vmem:[%s0] sm:$0xf]
  %v33 = vld [vmem:[%s1] sm:$0xf]
  %v34 = vld [vmem:[%s1 + $0x4] sm:$0xf]
  %v35 = vld [vmem:[%s1 + $0x8] sm:$0xf]
  %v36 = vld [vmem:[%s1 + $0xc] sm:$0xf]
  %v41 = vunpack.c.l.b16 %v33
  %v42 = vunpack.c.l.b16 %v34
  %v43 = vunpack.c.l.b16 %v35
  %v44 = vunpack.c.l.b16 %v36
  %v45 = vpack.c.b16 %v42, %v41
  %v46 = vpack.c.b16 %v44, %v43
  %vm49 = vcmask 261120
  %v51 = vsel %vm49, %v32, 0
  %53 = vmatpush.bf16.msra.mxu0 0
  %54 = vmatpush.bf16.msra.mxu0 0
  %55 = vmatpush.bf16.msra.mxu0 0
  %56 = vmatpush.bf16.msra.mxu0 0
  %57 = vmatpush.bf16.msra.mxu0 0
  %58 = vmatpush.bf16.msra.mxu0 0
  %59 = vmatpush.bf16.msra.mxu0 %v46
  %60 = vmatpush.bf16.msra.mxu0 %v45
  %61 = vmatmul.bf16.gmra.mxu0 %v51
  %v62 = vpop.f32.mrf.mxu0
  %v63 = vadd.f32 0.0, %v62
  %v64 = vpop.f32.mrf.mxu0
  %65 = vdwg.mxu0
  %v66 = vmul.f32 %v63, 14.285714
  %v67 = vld [vmem:[#allocation2] sm:$0xff]
  %vm68 = vcmask 64512
  %v69 = vsel %vm68, %v66, -inf
  %70 = vmax.xlane.f32.xlu0 %v69
  %v71 = vpop.xlane.xlu0 %70
  %v72 = vmax.f32 %v67, %v71
  %v73 = vsub.f32 %v67, %v72
  %v74 = vmul.f32 %v73, 1.442695
  %v75 = vpow.pop %v74
  %77 = vset.pattern.permute.xlu0 0
  %78 = vperm.xlu0 %77, %v72
  %v79 = vpop.permute.xlu0 %78
  %v81 = vsub.f32 %v66, %v79
  %v82 = vmul.f32 %v81, 1.442695
  %v83 = vpow.pop %v82
  %v84 = vld [vmem:[%s2] sm:$0xff]
  %v85 = vld [vmem:[%s3] sm:$0x1]
  %86 = vset.pattern.permute.xlu0 0
  %87 = vperm.xlu0 %86, %v84
  %v88 = vpop.permute.xlu0 %87
  %v89 = vperm.slane %v85, 0
  %vm90 = vcmp.eq.s32.totalorder %v88, %v89
  %s91 = smul.u32 0, 8
  %s92 = smul.u32 0, 8
  %s93 = sadd.s32 %s92, 8
  %p94 = scmp.lt.s32.totalorder %s91, %s93
  %s95 = sadd.s32 %s91, 8
  %p96 = scmp.lt.s32.totalorder %s92, %s95
  %p97 = pnand %p94, %p96
  %p98 = pneg %p97
  // Predicated region
  $region26: #{tpu_custom_call.1} parent=0 // pred_check
    _
  $region27: #{tpu_custom_call.1} parent=0 // pred_check_branch
    %100 = sbr.rel (%p97) target = $region29
  $region28: #{tpu_custom_call.1} parent=0 // pred_region
    %v101 = vlaneseq
    %v102 = vshrl.u32 %v101, 7
    %v103 = vstv %s91
    %v104 = vadd.s32 %v103, %v102
    %v105 = vlaneseq
    %v106 = vand.u32 %v105, 127
    %v107 = vstv %s92
    %v108 = vadd.s32 %v107, %v106
    %vm109 = vcmp.ne.s32.totalorder %v104, %v108
    %v110 = vsel %vm109, %v83, 0.0
    %vm111 = vmand %vm90, %vm109
    %v112 = vsel %vm111, 1.0, 0.0
    %v113 = vld [vmem:[#allocation3] sm:$0xff]
    %v114 = vmul.f32 %v75, %v113
    %v115 = vsel %vm68, %v110, 0.0
    %116 = vadd.xlane.f32.xlu0 %v115
    %v117 = vpop.xlane.xlu0 %116
    %v118 = vadd.f32 %v114, %v117
    %vm119 = vcmask 7168
    %120 = vst.msk [vmem:[#allocation3] sm:$0xff] %vm119, %v118
    %v121 = vld [vmem:[#allocation4] sm:$0xff]
    %v122 = vmul.f32 %v112, %v66
    %v123 = vsel %vm68, %v122, 0.0
    %124 = vadd.xlane.f32.xlu0 %v123
    %v125 = vpop.xlane.xlu0 %124
    %v126 = vadd.f32 %v121, %v125
    %127 = vst.msk [vmem:[#allocation4] sm:$0xff] %vm119, %v126
    %v128 = vld [vmem:[#allocation5] sm:$0xff]
    %v129 = vsel %vm68, %v112, 0.0
    %130 = vadd.xlane.f32.xlu0 %v129
    %v131 = vpop.xlane.xlu0 %130
    %v132 = vadd.f32 %v128, %v131
    %133 = vst.msk [vmem:[#allocation5] sm:$0xff] %vm119, %v132
    %134 = vst.msk [vmem:[#allocation2] sm:$0xff] %vm119, %v72
  $region29: #{tpu_custom_call.1} parent=0 // pred_fallthru
    _
  %p135 = pneg %p98
  // Predicated region
  $region30: #{tpu_custom_call.1} parent=0 // pred_check
    _
  $region31: #{tpu_custom_call.1} parent=0 // pred_check_branch
    %137 = sbr.rel (%p98) target = $region33
  $region32: #{tpu_custom_call.1} parent=0 // pred_region
    %v138 = vsel %vm90, 1, 0
    %v139 = vcvt.s32.f32 %v138
    %v140 = vld [vmem:[#allocation3] sm:$0xff]
    %v141 = vmul.f32 %v75, %v140
    %v142 = vsel %vm68, %v83, 0.0
    %143 = vadd.xlane.f32.xlu0 %v142
    %v144 = vpop.xlane.xlu0 %143
    %v145 = vadd.f32 %v141, %v144
    %vm146 = vcmask 7168
    %147 = vst.msk [vmem:[#allocation3] sm:$0xff] %vm146, %v145
    %v148 = vld [vmem:[#allocation4] sm:$0xff]
    %v149 = vmul.f32 %v139, %v66
    %v150 = vsel %vm68, %v149, 0.0
    %151 = vadd.xlane.f32.xlu0 %v150
    %v152 = vpop.xlane.xlu0 %151
    %v153 = vadd.f32 %v148, %v152
    %154 = vst.msk [vmem:[#allocation4] sm:$0xff] %vm146, %v153
    %v155 = vld [vmem:[#allocation5] sm:$0xff]
    %v156 = vsel %vm68, %v139, 0.0
    %157 = vadd.xlane.f32.xlu0 %v156
    %v158 = vpop.xlane.xlu0 %157
    %v159 = vadd.f32 %v155, %v158
    %160 = vst.msk [vmem:[#allocation5] sm:$0xff] %vm146, %v159
    %161 = vst.msk [vmem:[#allocation2] sm:$0xff] %vm146, %v72
  $region33: #{tpu_custom_call.1} parent=0 // pred_fallthru
    _
  // Predicated region
  $region34: #{tpu_custom_call.1} parent=0 // pred_check
    %p162 = pneg %p23
  $region35: #{tpu_custom_call.1} parent=0 // pred_check_branch
    %164 = sbr.rel (%p162) target = $region37
  $region36: #{tpu_custom_call.1} parent=0 // pred_region
    %v165 = vld [vmem:[#allocation5] sm:$0xff]
    %v166 = vld [vmem:[#allocation2] sm:$0xff]
    %v167 = vld [vmem:[#allocation3] sm:$0xff]
    %v168 = vlog2.pop %v167
    %v169 = vmul.f32 %v168, 0.6931472
    %v170 = vadd.f32 %v166, %v169
    %vm171 = vcmp.eq.f32.partialorder %v165, 0.0
    %v172 = vsel %vm171, 1, 0
    %v173 = vcvt.s32.f32 %v172
    %vm174 = vcmp.gt.f32.partialorder %v165, 0.0
    %v175 = vld [vmem:[#allocation4] sm:$0xff]
    %v176 = vmul.f32 %v165, %v170
    %v177 = vsub.f32 %v175, %v176
    %v178 = vadd.f32 %v165, %v173
    %v179 = vrcp.pop %v178
    %v180 = vmul.f32 %v178, %v179
    %v181 = vsub.f32 1.0, %v180
    %v182 = vmul.f32 %v179, %v181
    %v183 = vadd.f32 %v179, %v182
    %vm184 = vweird.f32 %v178
    %vm185 = vweird.f32 %v179
    %vm186 = vmor %vm184, %vm185
    %v187 = vsel %vm186, %v179, %v183
    %v188 = vand.u32 2147483647, %v178
    %vm189 = vcmp.eq.f32.partialorder %v188, 8.507059e+37
    %v190 = vand.u32 %v178, 2147483648
    %v191 = vor.u32 1.1754944e-38, %v190
    %v192 = vsel %vm189, %v191, %v187
    %v193 = vmul.f32 %v177, %v192
    %v194 = vsel %vm174, %v193, 0.0
    %v195 = vsub.f32 0.0, %v194
    %v196 = vsub.f32 1.0, %v173
    %v197 = vmul.f32 %v195, %v196
    %vm198 = vcmask 7168
    %199 = vst.msk [vmem:[%s5] sm:$0xff] %vm198, %v197
    %200 = vst.msk [vmem:[%s6] sm:$0xff] %vm198, %v173
  $region37: #{tpu_custom_call.1} parent=0 // pred_fallthru
    _
  // Predicated region
  $region38: #{tpu_custom_call.1} parent=0 // pred_check
    _
  $region39: #{tpu_custom_call.1} parent=0 // pred_check_branch
    %202 = sbr.rel (0) target = $region41
  $region40: #{tpu_custom_call.1} parent=0 // pred_region
    _
  $region41: #{tpu_custom_call.1} parent=0 // pred_fallthru
    _
  // Predicated region
  $region42: #{tpu_custom_call.1} parent=0 // pred_check
    _
  $region43: #{tpu_custom_call.1} parent=0 // pred_check_branch
    %204 = sbr.rel (0) target = $region45
  $region44: #{tpu_custom_call.1} parent=0 // pred_region
    _
  $region45: #{tpu_custom_call.1} parent=0 // pred_fallthru
    _
  // Predicated region
  $region46: #{tpu_custom_call.1} parent=0 // pred_check
    _
  $region47: #{tpu_custom_call.1} parent=0 // pred_check_branch
    %206 = sbr.rel (0) target = $region49
  $region48: #{tpu_custom_call.1} parent=0 // pred_region
    _
  $region49: #{tpu_custom_call.1} parent=0 // pred_fallthru
    _
  // Predicated region
  $region50: #{tpu_custom_call.1} parent=0 // pred_check
    _
  $region51: #{tpu_custom_call.1} parent=0 // pred_check_branch
    %208 = sbr.rel (0) target = $region53
  $region52: #{tpu_custom_call.1} parent=0 // pred_region
    _
  $region53: #{tpu_custom_call.1} parent=0 // pred_fallthru
    _

</llo_original>
